<compile_context>
chip_gen: v6e
topology: v6e:2x2x1
jax: 0.10.0
libtpu: 0.0.40
codegen_flags: <defaults>
</compile_context>

<pallas_src>
import functools

import jax
import jax.numpy as jnp
import numpy as np
from jax.experimental import pallas as pl
from jax.experimental.pallas import tpu as pltpu


def _round_up(x, m):
    return ((x + m - 1) // m) * m


# ---------------------------------------------------------------------------
# Pallas conv2d kernel: one program per batch-group, all output channels at once
# ---------------------------------------------------------------------------
def _gabor_conv_kernel(w_ref, x_ref, o_ref, *, k, wp, n_cols):
    """grid = (n_groups,).

    w_ref : VMEM (C_out, K*K)          single-channel Gabor bank (f32 in HBM)
    x_ref : VMEM (1, 1, n_cols + halo) channel-summed frames, (Hp, Wp) flattened
                                       to lanes, batches folded along lanes,
                                       zero halo tail (f32 in HBM)
    o_ref : VMEM (1, C_out, n_cols)    conv result, lane-dense (n_cols % 128 == 0)
    """
    # bf16 operands, f32 accumulation (halves the K^2-amplified im2col temp,
    # doubles MXU rate on v6e/v7x).
    frame = x_ref[0].astype(jnp.bfloat16)            # (1, n_cols + halo)
    w = w_ref[...].astype(jnp.bfloat16)              # (C_out, K*K)

    # im2col over the flat frame: tap (ky, kx) is the pure lane offset
    # ky*Wp + kx.  Each tap window spans the full 128-aligned compute width;
    # the halo tail keeps every slice in bounds.  (If the shift passes ever
    # bind the load slot they can move to the XLU via pltpu.roll; with
    # C_out=6 the MXU has ample slack either way.)
    taps = []
    for ky in range(k):
        for kx in range(k):
            off = ky * wp + kx
            taps.append(frame[:, off:off + n_cols])  # (1, n_cols)
    patches = jnp.concatenate(taps, axis=0)          # (K*K, n_cols) bf16

    # One MXU matmul produces every output channel, lane-dense, unmasked stores.
    out = jnp.dot(w, patches, preferred_element_type=jnp.float32)
    o_ref[0] = out.astype(o_ref.dtype)


def gabor_conv2d(x, gb, size, *, vmem_budget_bytes=20 << 20):
    """F.conv2d(x, tile(gb, C_in), padding=size // 2), stride 1, no bias."""
    n, c_in, h, w = x.shape
    c_out = gb.shape[0]
    k = size
    pad = size // 2
    hp, wp = h + 2 * pad, w + 2 * pad
    h_out = h + 2 * pad - k + 1
    w_out = w + 2 * pad - k + 1

    L = hp * wp                              # flat padded-frame length
    max_off = (k - 1) * wp + (k - 1)         # largest tap lane offset
    seg = _round_up(L, 128)                  # per-batch lane segment (compute width)
    halo = _round_up(max_off, 128)           # zero ghost tail so every tap is in bounds

    # Fold as many batches into one grid step as the VMEM budget allows
    # (amortizes per-step pipeline overhead on single-TC v5e/v6e).
    def step_bytes(f):
        wc = f * seg
        return (2 * (wc + halo) * 4          # input block, double buffered (f32)
                + (wc + halo) * 2            # bf16 frame copy
                + k * k * wc * 2             # im2col patches (bf16)
                + c_out * wc * 4             # matmul result (f32)
                + 2 * c_out * wc * 4)        # output block, double buffered (f32)

    n_fold = 1
    while n_fold < n and step_bytes(n_fold + 1) <= vmem_budget_bytes:
        n_fold += 1
    n_groups = -(-n // n_fold)
    n_total = n_groups * n_fold
    wc = n_fold * seg                        # compute / output columns per grid step

    # Layout prep (pure data movement, fused by XLA under jit): channel sum,
    # spatial pad, flatten (Hp, Wp) -> lanes, pad each frame to `seg`, fold
    # batches into groups along lanes, append the zero halo tail.
    xs = jnp.sum(x.astype(jnp.float32), axis=1)                      # (n, h, w)
    xs = jnp.pad(xs, ((0, n_total - n), (pad, pad), (pad, pad)))     # (n_total, hp, wp)
    xs = jnp.pad(xs.reshape(n_total, L), ((0, 0), (0, seg - L)))     # (n_total, seg)
    xs = xs.reshape(n_groups, n_fold * seg)
    xs = jnp.pad(xs, ((0, 0), (0, halo)))                            # (n_groups, wc+halo)
    x_prep = xs[:, None, :]                                          # (n_groups, 1, wc+halo)

    w2d = gb.reshape(c_out, k * k).astype(jnp.float32)

    kern = functools.partial(_gabor_conv_kernel, k=k, wp=wp, n_cols=wc)

    out_groups = pl.pallas_call(
        kern,
        out_shape=jax.ShapeDtypeStruct((n_groups, c_out, wc), jnp.float32),
        grid_spec=pltpu.PrefetchScalarGridSpec(
            num_scalar_prefetch=0,
            grid=(n_groups,),
            in_specs=[
                # Full single-channel weight matrix (matmul operand).
                pl.BlockSpec((c_out, k * k), lambda g: (0, 0)),
                # One folded lane-block of channel-summed frames per group.
                pl.BlockSpec((1, 1, wc + halo), lambda g: (g, 0, 0)),
            ],
            out_specs=pl.BlockSpec((1, c_out, wc), lambda g: (g, 0, 0)),
        ),
        compiler_params=pltpu.CompilerParams(
            # Group axis shards across TensorCores on multi-TC chips (v7x).
            dimension_semantics=("parallel",),
            # v5e's default scoped VMEM is only 16 MiB; be explicit everywhere.
            vmem_limit_bytes=32 * 1024 * 1024,
        ),
        cost_estimate=pl.CostEstimate(
            flops=2 * n_groups * c_out * k * k * wc,
            transcendentals=0,
            bytes_accessed=(c_out * k * k + n_groups * (wc + halo)
                            + n_groups * c_out * wc) * 4),
    )(w2d, x_prep)

    # Unfold: (n_groups, c_out, n_fold, seg) -> (n, c_out, hp, wp) -> valid crop.
    out = out_groups.reshape(n_groups, c_out, n_fold, seg)
    out = jnp.moveaxis(out, 2, 1).reshape(n_total, c_out, seg)[:n, :, :L]
    out = out.reshape(n, c_out, hp, wp)[:, :, :h_out, :w_out]
    return out.astype(x.dtype)


# ---------------------------------------------------------------------------
# Gabor filter bank (parameter setup, plain JAX) - single channel (C_out, K, K)
# ---------------------------------------------------------------------------
def gabor_bank(size, sigma, theta, lamda, gamma, psi):
    """Matches TrainableGaborFilter2._gabor_kernel for every output channel."""
    xmax = size // 2
    lin = jnp.linspace(-xmax, xmax, size, dtype=jnp.float32)
    xg, yg = jnp.meshgrid(lin, lin, indexing="ij")   # torch.meshgrid default 'ij'

    def one(s, th, lam, g, p):
        sigma_x = s
        sigma_y = s / g
        x_theta = xg * jnp.cos(th) + yg * jnp.sin(th)
        y_theta = -xg * jnp.sin(th) + yg * jnp.cos(th)
        return (jnp.exp(-0.5 * (x_theta ** 2 / sigma_x ** 2 +
                                y_theta ** 2 / sigma_y ** 2))
                * jnp.cos(2.0 * np.pi / lam * x_theta + p))

    return jax.vmap(one)(sigma, theta, lamda, gamma, psi)   # (C_out, K, K)


def trainable_gabor_filter2_forward(x, params, size, in_channels):
    assert x.shape[1] == in_channels
    gb = gabor_bank(size, params["sigma"], params["theta"], params["lamda"],
                    params["gamma"], params["psi"])
    # kernel.repeat(1, in_channels, 1, 1) tiles the SAME filter over every input
    # channel, so the conv reduces exactly to conv(sum_c x[:, c], gb); the
    # channel sum is done in the wrapper (fuses into the layout prep).
    return gabor_conv2d(x, gb, size)


# ---------------------------------------------------------------------------
# main
# ---------------------------------------------------------------------------
if __name__ == "__main__":
    size = 5            # odd kernel size -> 'same' output spatial dims
    in_channels = 3     # module default
    out_channels = 6    # module default
    batch, height, width = 2, 16, 16

    key = jax.random.PRNGKey(0)
    k1, k2, k3, k4, k5, kx = jax.random.split(key, 6)
    # Same distributions as the nn.Parameter initializers (torch.rand -> U[0,1)).
    params = {
        "sigma": jax.random.uniform(k1, (out_channels,), jnp.float32) * 10.0 + 1.0,
        "theta": jax.random.uniform(k2, (out_channels,), jnp.float32) * np.pi,
        "lamda": jax.random.uniform(k3, (out_channels,), jnp.float32) * 20.0 + 10.0,
        "gamma": jax.random.uniform(k4, (out_channels,), jnp.float32) * 0.5 + 0.5,
        "psi":   jax.random.uniform(k5, (out_channels,), jnp.float32) * 2.0 * np.pi - np.pi,
    }
    x = jax.random.normal(kx, (batch, in_channels, height, width), jnp.float32)

    forward = jax.jit(trainable_gabor_filter2_forward, static_argnums=(2, 3))
    out = forward(x, params, size, in_channels)
    out = jax.block_until_ready(out)
    assert out.shape == (batch, out_channels, height, width), out.shape

    # Cross-check against XLA's conv2d with the ORIGINAL tiled OIHW weights
    # (also validates the channel-sum identity and the bf16-patch accuracy).
    gb = gabor_bank(size, params["sigma"], params["theta"], params["lamda"],
                    params["gamma"], params["psi"])
    kernel_oihw = jnp.tile(gb[:, None, :, :], (1, in_channels, 1, 1))
    pad = size // 2
    ref = jax.lax.conv_general_dilated(
        x, kernel_oihw, window_strides=(1, 1), padding=[(pad, pad), (pad, pad)],
        dimension_numbers=("NCHW", "OIHW", "NCHW"),
        precision=jax.lax.Precision.HIGHEST)
    err = float(jnp.max(jnp.abs(out - ref)))
    scale = float(jnp.max(jnp.abs(ref)))
    # bf16 operands with f32 accumulation: allow 2% of the output scale.
    assert err <= 2e-2 * scale + 1e-3, f"max abs error {err} (scale {scale})"

    print("KERNEL_OK")
</pallas_src>

<mosaic_0001>
module attributes {stable_mosaic.version = 11 : i64} {
  func.func @_gabor_conv_kernel(%arg0: i32, %arg1: memref<6x25xf32, #tpu.memory_space<vmem>>, %arg2: memref<1x1x1152xf32, #tpu.memory_space<vmem>>, %arg3: memref<1x6x1024xf32, #tpu.memory_space<vmem>>) attributes {dimension_semantics = [#tpu.dimension_semantics<parallel>], iteration_bounds = array<i64: 1>, scalar_prefetch = 0 : i64, scratch_operands = 0 : i64, tpu.core_type = #tpu.core_type<tc>, window_params = [{pipeline_mode = #tpu.pipeline_mode<synchronous>, transform_indices = @transform_0, window_bounds = array<i64: 6, 25>}, {transform_indices = @transform_1, window_bounds = array<i64: 1, 1, 1152>}, {transform_indices = @transform_2, window_bounds = array<i64: 1, 6, 1024>}]} {
    %c0 = arith.constant 0 : index
    %c0_0 = arith.constant 0 : index
    %c0_1 = arith.constant 0 : index
    %0 = vector.load %arg2[%c0, %c0_0, %c0_1] : memref<1x1x1152xf32, #tpu.memory_space<vmem>>, vector<1x1x1152xf32>
    %1 = vector.shape_cast %0 : vector<1x1x1152xf32> to vector<1x1152xf32>
    %2 = arith.truncf %1 : vector<1x1152xf32> to vector<1x1152xbf16>
    %c0_2 = arith.constant 0 : index
    %c0_3 = arith.constant 0 : index
    %3 = vector.load %arg1[%c0_2, %c0_3] : memref<6x25xf32, #tpu.memory_space<vmem>>, vector<6x25xf32>
    %4 = arith.truncf %3 : vector<6x25xf32> to vector<6x25xbf16>
    %5 = vector.extract_strided_slice %2 {offsets = [0, 0], sizes = [1, 1024], strides = [1, 1]} : vector<1x1152xbf16> to vector<1x1024xbf16>
    %6 = vector.extract_strided_slice %2 {offsets = [0, 1], sizes = [1, 1024], strides = [1, 1]} : vector<1x1152xbf16> to vector<1x1024xbf16>
    %7 = vector.extract_strided_slice %2 {offsets = [0, 2], sizes = [1, 1024], strides = [1, 1]} : vector<1x1152xbf16> to vector<1x1024xbf16>
    %8 = vector.extract_strided_slice %2 {offsets = [0, 3], sizes = [1, 1024], strides = [1, 1]} : vector<1x1152xbf16> to vector<1x1024xbf16>
    %9 = vector.extract_strided_slice %2 {offsets = [0, 4], sizes = [1, 1024], strides = [1, 1]} : vector<1x1152xbf16> to vector<1x1024xbf16>
    %10 = vector.extract_strided_slice %2 {offsets = [0, 20], sizes = [1, 1024], strides = [1, 1]} : vector<1x1152xbf16> to vector<1x1024xbf16>
    %11 = vector.extract_strided_slice %2 {offsets = [0, 21], sizes = [1, 1024], strides = [1, 1]} : vector<1x1152xbf16> to vector<1x1024xbf16>
    %12 = vector.extract_strided_slice %2 {offsets = [0, 22], sizes = [1, 1024], strides = [1, 1]} : vector<1x1152xbf16> to vector<1x1024xbf16>
    %13 = vector.extract_strided_slice %2 {offsets = [0, 23], sizes = [1, 1024], strides = [1, 1]} : vector<1x1152xbf16> to vector<1x1024xbf16>
    %14 = vector.extract_strided_slice %2 {offsets = [0, 24], sizes = [1, 1024], strides = [1, 1]} : vector<1x1152xbf16> to vector<1x1024xbf16>
    %15 = vector.extract_strided_slice %2 {offsets = [0, 40], sizes = [1, 1024], strides = [1, 1]} : vector<1x1152xbf16> to vector<1x1024xbf16>
    %16 = vector.extract_strided_slice %2 {offsets = [0, 41], sizes = [1, 1024], strides = [1, 1]} : vector<1x1152xbf16> to vector<1x1024xbf16>
    %17 = vector.extract_strided_slice %2 {offsets = [0, 42], sizes = [1, 1024], strides = [1, 1]} : vector<1x1152xbf16> to vector<1x1024xbf16>
    %18 = vector.extract_strided_slice %2 {offsets = [0, 43], sizes = [1, 1024], strides = [1, 1]} : vector<1x1152xbf16> to vector<1x1024xbf16>
    %19 = vector.extract_strided_slice %2 {offsets = [0, 44], sizes = [1, 1024], strides = [1, 1]} : vector<1x1152xbf16> to vector<1x1024xbf16>
    %20 = vector.extract_strided_slice %2 {offsets = [0, 60], sizes = [1, 1024], strides = [1, 1]} : vector<1x1152xbf16> to vector<1x1024xbf16>
    %21 = vector.extract_strided_slice %2 {offsets = [0, 61], sizes = [1, 1024], strides = [1, 1]} : vector<1x1152xbf16> to vector<1x1024xbf16>
    %22 = vector.extract_strided_slice %2 {offsets = [0, 62], sizes = [1, 1024], strides = [1, 1]} : vector<1x1152xbf16> to vector<1x1024xbf16>
    %23 = vector.extract_strided_slice %2 {offsets = [0, 63], sizes = [1, 1024], strides = [1, 1]} : vector<1x1152xbf16> to vector<1x1024xbf16>
    %24 = vector.extract_strided_slice %2 {offsets = [0, 64], sizes = [1, 1024], strides = [1, 1]} : vector<1x1152xbf16> to vector<1x1024xbf16>
    %25 = vector.extract_strided_slice %2 {offsets = [0, 80], sizes = [1, 1024], strides = [1, 1]} : vector<1x1152xbf16> to vector<1x1024xbf16>
    %26 = vector.extract_strided_slice %2 {offsets = [0, 81], sizes = [1, 1024], strides = [1, 1]} : vector<1x1152xbf16> to vector<1x1024xbf16>
    %27 = vector.extract_strided_slice %2 {offsets = [0, 82], sizes = [1, 1024], strides = [1, 1]} : vector<1x1152xbf16> to vector<1x1024xbf16>
    %28 = vector.extract_strided_slice %2 {offsets = [0, 83], sizes = [1, 1024], strides = [1, 1]} : vector<1x1152xbf16> to vector<1x1024xbf16>
    %29 = vector.extract_strided_slice %2 {offsets = [0, 84], sizes = [1, 1024], strides = [1, 1]} : vector<1x1152xbf16> to vector<1x1024xbf16>
    %30 = tpu.concatenate %5, %6, %7, %8, %9, %10, %11, %12, %13, %14, %15, %16, %17, %18, %19, %20 in 0 : vector<1x1024xbf16>, vector<1x1024xbf16>, vector<1x1024xbf16>, vector<1x1024xbf16>, vector<1x1024xbf16>, vector<1x1024xbf16>, vector<1x1024xbf16>, vector<1x1024xbf16>, vector<1x1024xbf16>, vector<1x1024xbf16>, vector<1x1024xbf16>, vector<1x1024xbf16>, vector<1x1024xbf16>, vector<1x1024xbf16>, vector<1x1024xbf16>, vector<1x1024xbf16> -> vector<16x1024xbf16>
    %31 = tpu.concatenate %21, %22, %23, %24, %25, %26, %27, %28, %29 in 0 : vector<1x1024xbf16>, vector<1x1024xbf16>, vector<1x1024xbf16>, vector<1x1024xbf16>, vector<1x1024xbf16>, vector<1x1024xbf16>, vector<1x1024xbf16>, vector<1x1024xbf16>, vector<1x1024xbf16> -> vector<9x1024xbf16>
    %32 = tpu.concatenate %30, %31 in 0 : vector<16x1024xbf16>, vector<9x1024xbf16> -> vector<25x1024xbf16>
    %cst = arith.constant dense<0.000000e+00> : vector<6x1024xf32>
    %33 = tpu.matmul %4, %32, %cst {dimension_numbers = #tpu.dot_dimension_numbers<[1], [0], [0], [1], [0, 0, 1, 1], [], []>} : vector<6x25xbf16>, vector<25x1024xbf16>, vector<6x1024xf32> -> vector<6x1024xf32>
    %c0_4 = arith.constant 0 : index
    %c0_5 = arith.constant 0 : index
    %c0_6 = arith.constant 0 : index
    %34 = vector.load %arg3[%c0_4, %c0_5, %c0_6] : memref<1x6x1024xf32, #tpu.memory_space<vmem>>, vector<1x6x1024xf32>
    %35 = vector.shape_cast %34 : vector<1x6x1024xf32> to vector<6x1024xf32>
    %36 = vector.shape_cast %33 : vector<6x1024xf32> to vector<1x6x1024xf32>
    tpu.vector_store %arg3[%c0_4, %c0_5, %c0_6], %36 {strides = array<i32>} : memref<1x6x1024xf32, #tpu.memory_space<vmem>>, vector<1x6x1024xf32>,
    return
  }
  func.func @transform_0(%arg0: i32) -> (i32, i32) {
    %c0_i32 = arith.constant 0 : i32
    %c0_i32_0 = arith.constant 0 : i32
    %c0_i32_1 = arith.constant 0 : i32
    return %c0_i32, %c0_i32_0 : i32, i32
  }
  func.func @transform_1(%arg0: i32) -> (i32, i32, i32) {
    %c0_i32 = arith.constant 0 : i32
    %c0_i32_0 = arith.constant 0 : i32
    %c0_i32_1 = arith.constant 0 : i32
    return %arg0, %c0_i32, %c0_i32_0 : i32, i32, i32
  }
  func.func @transform_2(%arg0: i32) -> (i32, i32, i32) {
    %c0_i32 = arith.constant 0 : i32
    %c0_i32_0 = arith.constant 0 : i32
    %c0_i32_1 = arith.constant 0 : i32
    return %arg0, %c0_i32, %c0_i32_0 : i32, i32, i32
  }
}

</mosaic_0001>

<llo_original>
// kernel: trainable_gabor_filter2_forward.1
$region0: #{trainable_gabor_filter2_forward.1}
  #allocation0 [shape = 'u32[]', space=smem, size = 0x4, offset = 0x4, fixed_abs, tag = 'smem constant byte address 0x4 - core index']
  #allocation1 [shape = 'u32[144,128]{1,0:T(1,128)}', space=vmem, size = 0x12000, scoped, tag = 'internal scratch']
  %s0 = inlined_call_operand.vmem [shape: f32[6,25], index: 0, kind: input, shape index: {}]
  %s1 = inlined_call_operand.vmem [shape: f32[1,1,1152], index: 1, kind: input, shape index: {}]
  %s2 = inlined_call_operand.vmem [shape: f32[1,6,1024], index: 2, kind: output, shape index: {}]
  %s3 = sld [smem:[#allocation0]]
  $region18: #{trainable_gabor_filter2_forward.1} parent=0
    _
  %s5 = ssub.s32 1, %s3
  %s6 = scalar_select 0, %s5, %s3
  // Predicated region
  $region2: #{trainable_gabor_filter2_forward.1} parent=0 // pred_check
    _
  $region3: #{trainable_gabor_filter2_forward.1} parent=0 // pred_check_branch
    %8 = sbr.rel (0) target = $region5
  $region4: #{trainable_gabor_filter2_forward.1} parent=0 // pred_region
    _
  $region5: #{trainable_gabor_filter2_forward.1} parent=0 // pred_fallthru
    _
  // Predicated region
  $region6: #{trainable_gabor_filter2_forward.1} parent=0 // pred_check
    _
  $region7: #{trainable_gabor_filter2_forward.1} parent=0 // pred_check_branch
    %10 = sbr.rel (0) target = $region9
  $region8: #{trainable_gabor_filter2_forward.1} parent=0 // pred_region
    _
  $region9: #{trainable_gabor_filter2_forward.1} parent=0 // pred_fallthru
    _
  %v12 = vld [vmem:[%s1] sm:$0xff]
  %v13 = vld [vmem:[%s1 + $0x8] sm:$0x1]
  %v16 = vlaneseq
  %v17 = vshrl.u32 %v16, 7
  %v18 = vsub.s32 0, %v17
  %v19 = vrot.slane %v12, %v18
  %v20 = vlaneseq
  %v21 = vshrl.u32 %v20, 7
  %v22 = vsub.s32 1, %v21
  %v23 = vrot.slane %v12, %v22
  %v24 = vlaneseq
  %v25 = vshrl.u32 %v24, 7
  %v26 = vsub.s32 2, %v25
  %v27 = vrot.slane %v12, %v26
  %v28 = vlaneseq
  %v29 = vshrl.u32 %v28, 7
  %v30 = vsub.s32 3, %v29
  %v31 = vrot.slane %v12, %v30
  %v32 = vlaneseq
  %v33 = vshrl.u32 %v32, 7
  %v34 = vsub.s32 4, %v33
  %v35 = vrot.slane %v12, %v34
  %v36 = vlaneseq
  %v37 = vshrl.u32 %v36, 7
  %v38 = vsub.s32 5, %v37
  %v39 = vrot.slane %v12, %v38
  %v40 = vlaneseq
  %v41 = vshrl.u32 %v40, 7
  %v42 = vsub.s32 6, %v41
  %v43 = vrot.slane %v12, %v42
  %v44 = vlaneseq
  %v45 = vshrl.u32 %v44, 7
  %v46 = vsub.s32 7, %v45
  %v47 = vrot.slane %v12, %v46
  %v48 = vlaneseq
  %v49 = vshrl.u32 %v48, 7
  %v50 = vsub.s32 0, %v49
  %v51 = vrot.slane %v13, %v50
  %v61 = vpack.c.bf16 %v19, %v19
  %v62 = vpack.c.bf16 %v23, %v23
  %v63 = vpack.c.bf16 %v27, %v27
  %v64 = vpack.c.bf16 %v31, %v31
  %v65 = vpack.c.bf16 %v35, %v35
  %v66 = vpack.c.bf16 %v39, %v39
  %v67 = vpack.c.bf16 %v43, %v43
  %v68 = vpack.c.bf16 %v47, %v47
  %v69 = vpack.c.bf16 %v51, %v51
  %v70 = vld [vmem:[%s0] sm:$0x3f]
  %v71 = vpack.c.bf16 %v70, %v70
  %v73 = vshll.u32 %v61, 16
  %v76 = vshll.u32 %v62, 16
  %v79 = vshll.u32 %v63, 16
  %v82 = vshll.u32 %v64, 16
  %v85 = vshll.u32 %v65, 16
  %v88 = vshll.u32 %v66, 16
  %v91 = vshll.u32 %v67, 16
  %v94 = vshll.u32 %v68, 16
  %v97 = vshll.u32 %v69, 16
  %99 = vrot.lane.b32.xlu0 %v73, 127
  %v100 = vpop.permute.xlu0 %99
  %101 = vrot.lane.b32.xlu0 %v76, 127
  %v102 = vpop.permute.xlu0 %101
  %103 = vrot.lane.b32.xlu0 %v79, 127
  %v104 = vpop.permute.xlu0 %103
  %105 = vrot.lane.b32.xlu0 %v82, 127
  %v106 = vpop.permute.xlu0 %105
  %107 = vrot.lane.b32.xlu0 %v85, 127
  %v108 = vpop.permute.xlu0 %107
  %109 = vrot.lane.b32.xlu0 %v88, 127
  %v110 = vpop.permute.xlu0 %109
  %111 = vrot.lane.b32.xlu0 %v91, 127
  %v112 = vpop.permute.xlu0 %111
  %113 = vrot.lane.b32.xlu0 %v94, 127
  %v114 = vpop.permute.xlu0 %113
  %115 = vrot.lane.b32.xlu0 %v97, 127
  %v116 = vpop.permute.xlu0 %115
  %vm117 = vcmask 1039360
  %v118 = vsel %vm117, %v100, %v102
  %v119 = vsel %vm117, %v102, %v104
  %v120 = vsel %vm117, %v104, %v106
  %v121 = vsel %vm117, %v106, %v108
  %v122 = vsel %vm117, %v108, %v110
  %v123 = vsel %vm117, %v110, %v112
  %v124 = vsel %vm117, %v112, %v114
  %v125 = vsel %vm117, %v114, %v116
  %v143 = vrot.slane %v61, 7
  %v144 = vrot.slane %v62, 7
  %v145 = vrot.slane %v63, 7
  %v146 = vrot.slane %v64, 7
  %v147 = vrot.slane %v65, 7
  %v148 = vrot.slane %v66, 7
  %v149 = vrot.slane %v67, 7
  %v150 = vrot.slane %v68, 7
  %v151 = vrot.slane %v69, 7
  %152 = vrot.lane.b32.xlu0 %v143, 126
  %v153 = vpop.permute.xlu0 %152
  %154 = vrot.lane.b32.xlu0 %v144, 126
  %v155 = vpop.permute.xlu0 %154
  %156 = vrot.lane.b32.xlu0 %v145, 126
  %v157 = vpop.permute.xlu0 %156
  %158 = vrot.lane.b32.xlu0 %v146, 126
  %v159 = vpop.permute.xlu0 %158
  %160 = vrot.lane.b32.xlu0 %v147, 126
  %v161 = vpop.permute.xlu0 %160
  %162 = vrot.lane.b32.xlu0 %v148, 126
  %v163 = vpop.permute.xlu0 %162
  %164 = vrot.lane.b32.xlu0 %v149, 126
  %v165 = vpop.permute.xlu0 %164
  %166 = vrot.lane.b32.xlu0 %v150, 126
  %v167 = vpop.permute.xlu0 %166
  %168 = vrot.lane.b32.xlu0 %v151, 126
  %v169 = vpop.permute.xlu0 %168
  %vm170 = vcmask 1031168
  %v171 = vsel %vm170, %v153, %v155
  %v172 = vsel %vm170, %v155, %v157
  %v173 = vsel %vm170, %v157, %v159
  %v174 = vsel %vm170, %v159, %v161
  %v175 = vsel %vm170, %v161, %v163
  %v176 = vsel %vm170, %v163, %v165
  %v177 = vsel %vm170, %v165, %v167
  %v178 = vsel %vm170, %v167, %v169
  %v179 = vrot.slane %v73, 7
  %v180 = vrot.slane %v76, 7
  %v181 = vrot.slane %v79, 7
  %v182 = vrot.slane %v82, 7
  %v183 = vrot.slane %v85, 7
  %v184 = vrot.slane %v88, 7
  %v185 = vrot.slane %v91, 7
  %v186 = vrot.slane %v94, 7
  %v187 = vrot.slane %v97, 7
  %188 = vrot.lane.b32.xlu0 %v179, 125
  %v189 = vpop.permute.xlu0 %188
  %190 = vrot.lane.b32.xlu0 %v180, 125
  %v191 = vpop.permute.xlu0 %190
  %192 = vrot.lane.b32.xlu0 %v181, 125
  %v193 = vpop.permute.xlu0 %192
  %194 = vrot.lane.b32.xlu0 %v182, 125
  %v195 = vpop.permute.xlu0 %194
  %196 = vrot.lane.b32.xlu0 %v183, 125
  %v197 = vpop.permute.xlu0 %196
  %198 = vrot.lane.b32.xlu0 %v184, 125
  %v199 = vpop.permute.xlu0 %198
  %200 = vrot.lane.b32.xlu0 %v185, 125
  %v201 = vpop.permute.xlu0 %200
  %202 = vrot.lane.b32.xlu0 %v186, 125
  %v203 = vpop.permute.xlu0 %202
  %204 = vrot.lane.b32.xlu0 %v187, 125
  %v205 = vpop.permute.xlu0 %204
  %vm206 = vcmask 1022976
  %v207 = vsel %vm206, %v189, %v191
  %v208 = vsel %vm206, %v191, %v193
  %v209 = vsel %vm206, %v193, %v195
  %v210 = vsel %vm206, %v195, %v197
  %v211 = vsel %vm206, %v197, %v199
  %v212 = vsel %vm206, %v199, %v201
  %v213 = vsel %vm206, %v201, %v203
  %v214 = vsel %vm206, %v203, %v205
  %v223 = vrot.slane %v61, 6
  %v224 = vrot.slane %v62, 6
  %v225 = vrot.slane %v63, 6
  %v226 = vrot.slane %v64, 6
  %v227 = vrot.slane %v65, 6
  %v228 = vrot.slane %v66, 6
  %v229 = vrot.slane %v67, 6
  %v230 = vrot.slane %v68, 6
  %v231 = vrot.slane %v69, 6
  %232 = vrot.lane.b32.xlu0 %v223, 124
  %v233 = vpop.permute.xlu0 %232
  %234 = vrot.lane.b32.xlu0 %v224, 124
  %v235 = vpop.permute.xlu0 %234
  %236 = vrot.lane.b32.xlu0 %v225, 124
  %v237 = vpop.permute.xlu0 %236
  %238 = vrot.lane.b32.xlu0 %v226, 124
  %v239 = vpop.permute.xlu0 %238
  %240 = vrot.lane.b32.xlu0 %v227, 124
  %v241 = vpop.permute.xlu0 %240
  %242 = vrot.lane.b32.xlu0 %v228, 124
  %v243 = vpop.permute.xlu0 %242
  %244 = vrot.lane.b32.xlu0 %v229, 124
  %v245 = vpop.permute.xlu0 %244
  %246 = vrot.lane.b32.xlu0 %v230, 124
  %v247 = vpop.permute.xlu0 %246
  %248 = vrot.lane.b32.xlu0 %v231, 124
  %v249 = vpop.permute.xlu0 %248
  %vm250 = vcmask 1014784
  %v251 = vsel %vm250, %v233, %v235
  %v252 = vsel %vm250, %v235, %v237
  %v253 = vsel %vm250, %v237, %v239
  %v254 = vsel %vm250, %v239, %v241
  %v255 = vsel %vm250, %v241, %v243
  %v256 = vsel %vm250, %v243, %v245
  %v257 = vsel %vm250, %v245, %v247
  %v258 = vsel %vm250, %v247, %v249
  %v259 = vrot.slane %v73, 6
  %v260 = vrot.slane %v76, 6
  %v261 = vrot.slane %v79, 6
  %v262 = vrot.slane %v82, 6
  %v263 = vrot.slane %v85, 6
  %v264 = vrot.slane %v88, 6
  %v265 = vrot.slane %v91, 6
  %v266 = vrot.slane %v94, 6
  %v267 = vrot.slane %v97, 6
  %268 = vrot.lane.b32.xlu0 %v259, 108
  %v269 = vpop.permute.xlu0 %268
  %270 = vrot.lane.b32.xlu0 %v260, 108
  %v271 = vpop.permute.xlu0 %270
  %272 = vrot.lane.b32.xlu0 %v261, 108
  %v273 = vpop.permute.xlu0 %272
  %274 = vrot.lane.b32.xlu0 %v262, 108
  %v275 = vpop.permute.xlu0 %274
  %276 = vrot.lane.b32.xlu0 %v263, 108
  %v277 = vpop.permute.xlu0 %276
  %278 = vrot.lane.b32.xlu0 %v264, 108
  %v279 = vpop.permute.xlu0 %278
  %280 = vrot.lane.b32.xlu0 %v265, 108
  %v281 = vpop.permute.xlu0 %280
  %282 = vrot.lane.b32.xlu0 %v266, 108
  %v283 = vpop.permute.xlu0 %282
  %284 = vrot.lane.b32.xlu0 %v267, 108
  %v285 = vpop.permute.xlu0 %284
  %vm286 = vcmask 883712
  %v287 = vsel %vm286, %v269, %v271
  %v288 = vsel %vm286, %v271, %v273
  %v289 = vsel %vm286, %v273, %v275
  %v290 = vsel %vm286, %v275, %v277
  %v291 = vsel %vm286, %v277, %v279
  %v292 = vsel %vm286, %v279, %v281
  %v293 = vsel %vm286, %v281, %v283
  %v294 = vsel %vm286, %v283, %v285
  %v303 = vrot.slane %v61, 5
  %v304 = vrot.slane %v62, 5
  %v305 = vrot.slane %v63, 5
  %v306 = vrot.slane %v64, 5
  %v307 = vrot.slane %v65, 5
  %v308 = vrot.slane %v66, 5
  %v309 = vrot.slane %v67, 5
  %v310 = vrot.slane %v68, 5
  %v311 = vrot.slane %v69, 5
  %312 = vrot.lane.b32.xlu0 %v303, 107
  %v313 = vpop.permute.xlu0 %312
  %314 = vrot.lane.b32.xlu0 %v304, 107
  %v315 = vpop.permute.xlu0 %314
  %316 = vrot.lane.b32.xlu0 %v305, 107
  %v317 = vpop.permute.xlu0 %316
  %318 = vrot.lane.b32.xlu0 %v306, 107
  %v319 = vpop.permute.xlu0 %318
  %320 = vrot.lane.b32.xlu0 %v307, 107
  %v321 = vpop.permute.xlu0 %320
  %322 = vrot.lane.b32.xlu0 %v308, 107
  %v323 = vpop.permute.xlu0 %322
  %324 = vrot.lane.b32.xlu0 %v309, 107
  %v325 = vpop.permute.xlu0 %324
  %326 = vrot.lane.b32.xlu0 %v310, 107
  %v327 = vpop.permute.xlu0 %326
  %328 = vrot.lane.b32.xlu0 %v311, 107
  %v329 = vpop.permute.xlu0 %328
  %vm330 = vcmask 875520
  %v331 = vsel %vm330, %v313, %v315
  %v332 = vsel %vm330, %v315, %v317
  %v333 = vsel %vm330, %v317, %v319
  %v334 = vsel %vm330, %v319, %v321
  %v335 = vsel %vm330, %v321, %v323
  %v336 = vsel %vm330, %v323, %v325
  %v337 = vsel %vm330, %v325, %v327
  %v338 = vsel %vm330, %v327, %v329
  %v339 = vrot.slane %v73, 5
  %v340 = vrot.slane %v76, 5
  %v341 = vrot.slane %v79, 5
  %v342 = vrot.slane %v82, 5
  %v343 = vrot.slane %v85, 5
  %v344 = vrot.slane %v88, 5
  %v345 = vrot.slane %v91, 5
  %v346 = vrot.slane %v94, 5
  %v347 = vrot.slane %v97, 5
  %348 = vrot.lane.b32.xlu0 %v339, 106
  %v349 = vpop.permute.xlu0 %348
  %350 = vrot.lane.b32.xlu0 %v340, 106
  %v351 = vpop.permute.xlu0 %350
  %352 = vrot.lane.b32.xlu0 %v341, 106
  %v353 = vpop.permute.xlu0 %352
  %354 = vrot.lane.b32.xlu0 %v342, 106
  %v355 = vpop.permute.xlu0 %354
  %356 = vrot.lane.b32.xlu0 %v343, 106
  %v357 = vpop.permute.xlu0 %356
  %358 = vrot.lane.b32.xlu0 %v344, 106
  %v359 = vpop.permute.xlu0 %358
  %360 = vrot.lane.b32.xlu0 %v345, 106
  %v361 = vpop.permute.xlu0 %360
  %362 = vrot.lane.b32.xlu0 %v346, 106
  %v363 = vpop.permute.xlu0 %362
  %364 = vrot.lane.b32.xlu0 %v347, 106
  %v365 = vpop.permute.xlu0 %364
  %vm366 = vcmask 867328
  %v367 = vsel %vm366, %v349, %v351
  %v368 = vsel %vm366, %v351, %v353
  %v369 = vsel %vm366, %v353, %v355
  %v370 = vsel %vm366, %v355, %v357
  %v371 = vsel %vm366, %v357, %v359
  %v372 = vsel %vm366, %v359, %v361
  %v373 = vsel %vm366, %v361, %v363
  %v374 = vsel %vm366, %v363, %v365
  %v383 = vrot.slane %v61, 4
  %v384 = vrot.slane %v62, 4
  %v385 = vrot.slane %v63, 4
  %v386 = vrot.slane %v64, 4
  %v387 = vrot.slane %v65, 4
  %v388 = vrot.slane %v66, 4
  %v389 = vrot.slane %v67, 4
  %v390 = vrot.slane %v68, 4
  %v391 = vrot.slane %v69, 4
  %392 = vrot.lane.b32.xlu0 %v383, 105
  %v393 = vpop.permute.xlu0 %392
  %394 = vrot.lane.b32.xlu0 %v384, 105
  %v395 = vpop.permute.xlu0 %394
  %396 = vrot.lane.b32.xlu0 %v385, 105
  %v397 = vpop.permute.xlu0 %396
  %398 = vrot.lane.b32.xlu0 %v386, 105
  %v399 = vpop.permute.xlu0 %398
  %400 = vrot.lane.b32.xlu0 %v387, 105
  %v401 = vpop.permute.xlu0 %400
  %402 = vrot.lane.b32.xlu0 %v388, 105
  %v403 = vpop.permute.xlu0 %402
  %404 = vrot.lane.b32.xlu0 %v389, 105
  %v405 = vpop.permute.xlu0 %404
  %406 = vrot.lane.b32.xlu0 %v390, 105
  %v407 = vpop.permute.xlu0 %406
  %408 = vrot.lane.b32.xlu0 %v391, 105
  %v409 = vpop.permute.xlu0 %408
  %vm410 = vcmask 859136
  %v411 = vsel %vm410, %v393, %v395
  %v412 = vsel %vm410, %v395, %v397
  %v413 = vsel %vm410, %v397, %v399
  %v414 = vsel %vm410, %v399, %v401
  %v415 = vsel %vm410, %v401, %v403
  %v416 = vsel %vm410, %v403, %v405
  %v417 = vsel %vm410, %v405, %v407
  %v418 = vsel %vm410, %v407, %v409
  %v419 = vrot.slane %v73, 4
  %v420 = vrot.slane %v76, 4
  %v421 = vrot.slane %v79, 4
  %v422 = vrot.slane %v82, 4
  %v423 = vrot.slane %v85, 4
  %v424 = vrot.slane %v88, 4
  %v425 = vrot.slane %v91, 4
  %v426 = vrot.slane %v94, 4
  %v427 = vrot.slane %v97, 4
  %428 = vrot.lane.b32.xlu0 %v419, 104
  %v429 = vpop.permute.xlu0 %428
  %430 = vrot.lane.b32.xlu0 %v420, 104
  %v431 = vpop.permute.xlu0 %430
  %432 = vrot.lane.b32.xlu0 %v421, 104
  %v433 = vpop.permute.xlu0 %432
  %434 = vrot.lane.b32.xlu0 %v422, 104
  %v435 = vpop.permute.xlu0 %434
  %436 = vrot.lane.b32.xlu0 %v423, 104
  %v437 = vpop.permute.xlu0 %436
  %438 = vrot.lane.b32.xlu0 %v424, 104
  %v439 = vpop.permute.xlu0 %438
  %440 = vrot.lane.b32.xlu0 %v425, 104
  %v441 = vpop.permute.xlu0 %440
  %442 = vrot.lane.b32.xlu0 %v426, 104
  %v443 = vpop.permute.xlu0 %442
  %444 = vrot.lane.b32.xlu0 %v427, 104
  %v445 = vpop.permute.xlu0 %444
  %vm446 = vcmask 850944
  %v447 = vsel %vm446, %v429, %v431
  %v448 = vsel %vm446, %v431, %v433
  %v449 = vsel %vm446, %v433, %v435
  %v450 = vsel %vm446, %v435, %v437
  %v451 = vsel %vm446, %v437, %v439
  %v452 = vsel %vm446, %v439, %v441
  %v453 = vsel %vm446, %v441, %v443
  %v454 = vsel %vm446, %v443, %v445
  %v463 = vrot.slane %v61, 3
  %v464 = vrot.slane %v62, 3
  %v465 = vrot.slane %v63, 3
  %v466 = vrot.slane %v64, 3
  %v467 = vrot.slane %v65, 3
  %v468 = vrot.slane %v66, 3
  %v469 = vrot.slane %v67, 3
  %v470 = vrot.slane %v68, 3
  %v471 = vrot.slane %v69, 3
  %472 = vrot.lane.b32.xlu0 %v463, 88
  %v473 = vpop.permute.xlu0 %472
  %474 = vrot.lane.b32.xlu0 %v464, 88
  %v475 = vpop.permute.xlu0 %474
  %476 = vrot.lane.b32.xlu0 %v465, 88
  %v477 = vpop.permute.xlu0 %476
  %478 = vrot.lane.b32.xlu0 %v466, 88
  %v479 = vpop.permute.xlu0 %478
  %480 = vrot.lane.b32.xlu0 %v467, 88
  %v481 = vpop.permute.xlu0 %480
  %482 = vrot.lane.b32.xlu0 %v468, 88
  %v483 = vpop.permute.xlu0 %482
  %484 = vrot.lane.b32.xlu0 %v469, 88
  %v485 = vpop.permute.xlu0 %484
  %486 = vrot.lane.b32.xlu0 %v470, 88
  %v487 = vpop.permute.xlu0 %486
  %488 = vrot.lane.b32.xlu0 %v471, 88
  %v489 = vpop.permute.xlu0 %488
  %vm490 = vcmask 719872
  %v491 = vsel %vm490, %v473, %v475
  %v492 = vsel %vm490, %v475, %v477
  %v493 = vsel %vm490, %v477, %v479
  %v494 = vsel %vm490, %v479, %v481
  %v495 = vsel %vm490, %v481, %v483
  %v496 = vsel %vm490, %v483, %v485
  %v497 = vsel %vm490, %v485, %v487
  %v498 = vsel %vm490, %v487, %v489
  %v499 = vrot.slane %v73, 3
  %v500 = vrot.slane %v76, 3
  %v501 = vrot.slane %v79, 3
  %v502 = vrot.slane %v82, 3
  %v503 = vrot.slane %v85, 3
  %v504 = vrot.slane %v88, 3
  %v505 = vrot.slane %v91, 3
  %v506 = vrot.slane %v94, 3
  %v507 = vrot.slane %v97, 3
  %508 = vrot.lane.b32.xlu0 %v499, 87
  %v509 = vpop.permute.xlu0 %508
  %510 = vrot.lane.b32.xlu0 %v500, 87
  %v511 = vpop.permute.xlu0 %510
  %512 = vrot.lane.b32.xlu0 %v501, 87
  %v513 = vpop.permute.xlu0 %512
  %514 = vrot.lane.b32.xlu0 %v502, 87
  %v515 = vpop.permute.xlu0 %514
  %516 = vrot.lane.b32.xlu0 %v503, 87
  %v517 = vpop.permute.xlu0 %516
  %518 = vrot.lane.b32.xlu0 %v504, 87
  %v519 = vpop.permute.xlu0 %518
  %520 = vrot.lane.b32.xlu0 %v505, 87
  %v521 = vpop.permute.xlu0 %520
  %522 = vrot.lane.b32.xlu0 %v506, 87
  %v523 = vpop.permute.xlu0 %522
  %524 = vrot.lane.b32.xlu0 %v507, 87
  %v525 = vpop.permute.xlu0 %524
  %vm526 = vcmask 711680
  %v527 = vsel %vm526, %v509, %v511
  %v528 = vsel %vm526, %v511, %v513
  %v529 = vsel %vm526, %v513, %v515
  %v530 = vsel %vm526, %v515, %v517
  %v531 = vsel %vm526, %v517, %v519
  %v532 = vsel %vm526, %v519, %v521
  %v533 = vsel %vm526, %v521, %v523
  %v534 = vsel %vm526, %v523, %v525
  %v543 = vrot.slane %v61, 2
  %v544 = vrot.slane %v62, 2
  %v545 = vrot.slane %v63, 2
  %v546 = vrot.slane %v64, 2
  %v547 = vrot.slane %v65, 2
  %v548 = vrot.slane %v66, 2
  %v549 = vrot.slane %v67, 2
  %v550 = vrot.slane %v68, 2
  %v551 = vrot.slane %v69, 2
  %552 = vrot.lane.b32.xlu0 %v543, 86
  %v553 = vpop.permute.xlu0 %552
  %554 = vrot.lane.b32.xlu0 %v544, 86
  %v555 = vpop.permute.xlu0 %554
  %556 = vrot.lane.b32.xlu0 %v545, 86
  %v557 = vpop.permute.xlu0 %556
  %558 = vrot.lane.b32.xlu0 %v546, 86
  %v559 = vpop.permute.xlu0 %558
  %560 = vrot.lane.b32.xlu0 %v547, 86
  %v561 = vpop.permute.xlu0 %560
  %562 = vrot.lane.b32.xlu0 %v548, 86
  %v563 = vpop.permute.xlu0 %562
  %564 = vrot.lane.b32.xlu0 %v549, 86
  %v565 = vpop.permute.xlu0 %564
  %566 = vrot.lane.b32.xlu0 %v550, 86
  %v567 = vpop.permute.xlu0 %566
  %568 = vrot.lane.b32.xlu0 %v551, 86
  %v569 = vpop.permute.xlu0 %568
  %vm570 = vcmask 703488
  %v571 = vsel %vm570, %v553, %v555
  %v572 = vsel %vm570, %v555, %v557
  %v573 = vsel %vm570, %v557, %v559
  %v574 = vsel %vm570, %v559, %v561
  %v575 = vsel %vm570, %v561, %v563
  %v576 = vsel %vm570, %v563, %v565
  %v577 = vsel %vm570, %v565, %v567
  %v578 = vsel %vm570, %v567, %v569
  %v579 = vrot.slane %v73, 2
  %v580 = vrot.slane %v76, 2
  %v581 = vrot.slane %v79, 2
  %v582 = vrot.slane %v82, 2
  %v583 = vrot.slane %v85, 2
  %v584 = vrot.slane %v88, 2
  %v585 = vrot.slane %v91, 2
  %v586 = vrot.slane %v94, 2
  %v587 = vrot.slane %v97, 2
  %588 = vrot.lane.b32.xlu0 %v579, 85
  %v589 = vpop.permute.xlu0 %588
  %590 = vrot.lane.b32.xlu0 %v580, 85
  %v591 = vpop.permute.xlu0 %590
  %592 = vrot.lane.b32.xlu0 %v581, 85
  %v593 = vpop.permute.xlu0 %592
  %594 = vrot.lane.b32.xlu0 %v582, 85
  %v595 = vpop.permute.xlu0 %594
  %596 = vrot.lane.b32.xlu0 %v583, 85
  %v597 = vpop.permute.xlu0 %596
  %598 = vrot.lane.b32.xlu0 %v584, 85
  %v599 = vpop.permute.xlu0 %598
  %600 = vrot.lane.b32.xlu0 %v585, 85
  %v601 = vpop.permute.xlu0 %600
  %602 = vrot.lane.b32.xlu0 %v586, 85
  %v603 = vpop.permute.xlu0 %602
  %604 = vrot.lane.b32.xlu0 %v587, 85
  %v605 = vpop.permute.xlu0 %604
  %vm606 = vcmask 695296
  %v607 = vsel %vm606, %v589, %v591
  %v608 = vsel %vm606, %v591, %v593
  %v609 = vsel %vm606, %v593, %v595
  %v610 = vsel %vm606, %v595, %v597
  %v611 = vsel %vm606, %v597, %v599
  %v612 = vsel %vm606, %v599, %v601
  %v613 = vsel %vm606, %v601, %v603
  %v614 = vsel %vm606, %v603, %v605
  %v623 = vrot.slane %v61, 1
  %v624 = vrot.slane %v62, 1
  %v625 = vrot.slane %v63, 1
  %v626 = vrot.slane %v64, 1
  %v627 = vrot.slane %v65, 1
  %v628 = vrot.slane %v66, 1
  %v629 = vrot.slane %v67, 1
  %v630 = vrot.slane %v68, 1
  %v631 = vrot.slane %v69, 1
  %632 = vrot.lane.b32.xlu0 %v623, 84
  %v633 = vpop.permute.xlu0 %632
  %634 = vrot.lane.b32.xlu0 %v624, 84
  %v635 = vpop.permute.xlu0 %634
  %636 = vrot.lane.b32.xlu0 %v625, 84
  %v637 = vpop.permute.xlu0 %636
  %638 = vrot.lane.b32.xlu0 %v626, 84
  %v639 = vpop.permute.xlu0 %638
  %640 = vrot.lane.b32.xlu0 %v627, 84
  %v641 = vpop.permute.xlu0 %640
  %642 = vrot.lane.b32.xlu0 %v628, 84
  %v643 = vpop.permute.xlu0 %642
  %644 = vrot.lane.b32.xlu0 %v629, 84
  %v645 = vpop.permute.xlu0 %644
  %646 = vrot.lane.b32.xlu0 %v630, 84
  %v647 = vpop.permute.xlu0 %646
  %648 = vrot.lane.b32.xlu0 %v631, 84
  %v649 = vpop.permute.xlu0 %648
  %vm650 = vcmask 687104
  %v651 = vsel %vm650, %v633, %v635
  %v652 = vsel %vm650, %v635, %v637
  %v653 = vsel %vm650, %v637, %v639
  %v654 = vsel %vm650, %v639, %v641
  %v655 = vsel %vm650, %v641, %v643
  %v656 = vsel %vm650, %v643, %v645
  %v657 = vsel %vm650, %v645, %v647
  %v658 = vsel %vm650, %v647, %v649
  %v659 = vrot.slane %v73, 1
  %v660 = vrot.slane %v76, 1
  %v661 = vrot.slane %v79, 1
  %v662 = vrot.slane %v82, 1
  %v663 = vrot.slane %v85, 1
  %v664 = vrot.slane %v88, 1
  %v665 = vrot.slane %v91, 1
  %v666 = vrot.slane %v94, 1
  %v667 = vrot.slane %v97, 1
  %668 = vrot.lane.b32.xlu0 %v659, 68
  %v669 = vpop.permute.xlu0 %668
  %670 = vrot.lane.b32.xlu0 %v660, 68
  %v671 = vpop.permute.xlu0 %670
  %672 = vrot.lane.b32.xlu0 %v661, 68
  %v673 = vpop.permute.xlu0 %672
  %674 = vrot.lane.b32.xlu0 %v662, 68
  %v675 = vpop.permute.xlu0 %674
  %676 = vrot.lane.b32.xlu0 %v663, 68
  %v677 = vpop.permute.xlu0 %676
  %678 = vrot.lane.b32.xlu0 %v664, 68
  %v679 = vpop.permute.xlu0 %678
  %680 = vrot.lane.b32.xlu0 %v665, 68
  %v681 = vpop.permute.xlu0 %680
  %682 = vrot.lane.b32.xlu0 %v666, 68
  %v683 = vpop.permute.xlu0 %682
  %684 = vrot.lane.b32.xlu0 %v667, 68
  %v685 = vpop.permute.xlu0 %684
  %vm686 = vcmask 556032
  %v687 = vsel %vm686, %v669, %v671
  %v688 = vsel %vm686, %v671, %v673
  %v689 = vsel %vm686, %v673, %v675
  %v690 = vsel %vm686, %v675, %v677
  %v691 = vsel %vm686, %v677, %v679
  %v692 = vsel %vm686, %v679, %v681
  %v693 = vsel %vm686, %v681, %v683
  %v694 = vsel %vm686, %v683, %v685
  %vm703 = vcmask 1040384
  %vm704 = vsmask.f32 256
  %vm705 = vmand %vm703, %vm704
  %v706 = vsel %vm705, %v61, %v118
  %v707 = vsel %vm705, %v62, %v119
  %v708 = vsel %vm705, %v63, %v120
  %v709 = vsel %vm705, %v64, %v121
  %v710 = vsel %vm705, %v65, %v122
  %v711 = vsel %vm705, %v66, %v123
  %v712 = vsel %vm705, %v67, %v124
  %v713 = vsel %vm705, %v68, %v125
  %vm714 = vcmask 1040384
  %v717 = vsel %vm714, %v706, %v171
  %v721 = vsel %vm714, %v707, %v172
  %v725 = vsel %vm714, %v708, %v173
  %v729 = vsel %vm714, %v709, %v174
  %v733 = vsel %vm714, %v710, %v175
  %v737 = vsel %vm714, %v711, %v176
  %v741 = vsel %vm714, %v712, %v177
  %v745 = vsel %vm714, %v713, %v178
  %vm747 = vcmask 1041408
  %vm748 = vsmask.f32 1280
  %vm749 = vmand %vm747, %vm748
  %v750 = vsel %vm749, %v717, %v207
  %v751 = vsel %vm749, %v721, %v208
  %v752 = vsel %vm749, %v725, %v209
  %v753 = vsel %vm749, %v729, %v210
  %v754 = vsel %vm749, %v733, %v211
  %v755 = vsel %vm749, %v737, %v212
  %v756 = vsel %vm749, %v741, %v213
  %v757 = vsel %vm749, %v745, %v214
  %vm758 = vcmask 1041408
  %v761 = vsel %vm758, %v750, %v251
  %v765 = vsel %vm758, %v751, %v252
  %v769 = vsel %vm758, %v752, %v253
  %v773 = vsel %vm758, %v753, %v254
  %v777 = vsel %vm758, %v754, %v255
  %v781 = vsel %vm758, %v755, %v256
  %v785 = vsel %vm758, %v756, %v257
  %v789 = vsel %vm758, %v757, %v258
  %vm791 = vcmask 1042432
  %vm792 = vsmask.f32 2304
  %vm793 = vmand %vm791, %vm792
  %v794 = vsel %vm793, %v761, %v287
  %v795 = vsel %vm793, %v765, %v288
  %v796 = vsel %vm793, %v769, %v289
  %v797 = vsel %vm793, %v773, %v290
  %v798 = vsel %vm793, %v777, %v291
  %v799 = vsel %vm793, %v781, %v292
  %v800 = vsel %vm793, %v785, %v293
  %v801 = vsel %vm793, %v789, %v294
  %vm802 = vcmask 1042432
  %v805 = vsel %vm802, %v794, %v331
  %v809 = vsel %vm802, %v795, %v332
  %v813 = vsel %vm802, %v796, %v333
  %v817 = vsel %vm802, %v797, %v334
  %v821 = vsel %vm802, %v798, %v335
  %v825 = vsel %vm802, %v799, %v336
  %v829 = vsel %vm802, %v800, %v337
  %v833 = vsel %vm802, %v801, %v338
  %vm835 = vcmask 1043456
  %vm836 = vsmask.f32 3328
  %vm837 = vmand %vm835, %vm836
  %v838 = vsel %vm837, %v805, %v367
  %v839 = vsel %vm837, %v809, %v368
  %v840 = vsel %vm837, %v813, %v369
  %v841 = vsel %vm837, %v817, %v370
  %v842 = vsel %vm837, %v821, %v371
  %v843 = vsel %vm837, %v825, %v372
  %v844 = vsel %vm837, %v829, %v373
  %v845 = vsel %vm837, %v833, %v374
  %vm846 = vcmask 1043456
  %v849 = vsel %vm846, %v838, %v411
  %v853 = vsel %vm846, %v839, %v412
  %v857 = vsel %vm846, %v840, %v413
  %v861 = vsel %vm846, %v841, %v414
  %v865 = vsel %vm846, %v842, %v415
  %v869 = vsel %vm846, %v843, %v416
  %v873 = vsel %vm846, %v844, %v417
  %v877 = vsel %vm846, %v845, %v418
  %vm879 = vcmask 1044480
  %vm880 = vsmask.f32 4352
  %vm881 = vmand %vm879, %vm880
  %v882 = vsel %vm881, %v849, %v447
  %v883 = vsel %vm881, %v853, %v448
  %v884 = vsel %vm881, %v857, %v449
  %v885 = vsel %vm881, %v861, %v450
  %v886 = vsel %vm881, %v865, %v451
  %v887 = vsel %vm881, %v869, %v452
  %v888 = vsel %vm881, %v873, %v453
  %v889 = vsel %vm881, %v877, %v454
  %vm890 = vcmask 1044480
  %v893 = vsel %vm890, %v882, %v491
  %v897 = vsel %vm890, %v883, %v492
  %v901 = vsel %vm890, %v884, %v493
  %v905 = vsel %vm890, %v885, %v494
  %v909 = vsel %vm890, %v886, %v495
  %v913 = vsel %vm890, %v887, %v496
  %v917 = vsel %vm890, %v888, %v497
  %v921 = vsel %vm890, %v889, %v498
  %vm923 = vcmask 1045504
  %vm924 = vsmask.f32 5376
  %vm925 = vmand %vm923, %vm924
  %v926 = vsel %vm925, %v893, %v527
  %v927 = vsel %vm925, %v897, %v528
  %v928 = vsel %vm925, %v901, %v529
  %v929 = vsel %vm925, %v905, %v530
  %v930 = vsel %vm925, %v909, %v531
  %v931 = vsel %vm925, %v913, %v532
  %v932 = vsel %vm925, %v917, %v533
  %v933 = vsel %vm925, %v921, %v534
  %vm934 = vcmask 1045504
  %v937 = vsel %vm934, %v926, %v571
  %v941 = vsel %vm934, %v927, %v572
  %v945 = vsel %vm934, %v928, %v573
  %v949 = vsel %vm934, %v929, %v574
  %v953 = vsel %vm934, %v930, %v575
  %v957 = vsel %vm934, %v931, %v576
  %v961 = vsel %vm934, %v932, %v577
  %v965 = vsel %vm934, %v933, %v578
  %vm967 = vcmask 1046528
  %vm968 = vsmask.f32 6400
  %vm969 = vmand %vm967, %vm968
  %v970 = vsel %vm969, %v937, %v607
  %v971 = vsel %vm969, %v941, %v608
  %v972 = vsel %vm969, %v945, %v609
  %v973 = vsel %vm969, %v949, %v610
  %v974 = vsel %vm969, %v953, %v611
  %v975 = vsel %vm969, %v957, %v612
  %v976 = vsel %vm969, %v961, %v613
  %v977 = vsel %vm969, %v965, %v614
  %vm978 = vcmask 1046528
  %v981 = vsel %vm978, %v970, %v651
  %v985 = vsel %vm978, %v971, %v652
  %v989 = vsel %vm978, %v972, %v653
  %v993 = vsel %vm978, %v973, %v654
  %v997 = vsel %vm978, %v974, %v655
  %v1001 = vsel %vm978, %v975, %v656
  %v1005 = vsel %vm978, %v976, %v657
  %v1009 = vsel %vm978, %v977, %v658
  %vm1011 = vcmask 1047552
  %vm1012 = vsmask.f32 7424
  %vm1013 = vmand %vm1011, %vm1012
  %v1014 = vsel %vm1013, %v981, %v687
  %v1015 = vsel %vm1013, %v985, %v688
  %v1016 = vsel %vm1013, %v989, %v689
  %v1017 = vsel %vm1013, %v993, %v690
  %v1018 = vsel %vm1013, %v997, %v691
  %v1019 = vsel %vm1013, %v1001, %v692
  %v1020 = vsel %vm1013, %v1005, %v693
  %v1021 = vsel %vm1013, %v1009, %v694
  %1024 = vrot.lane.b32.xlu0 %v223, 109
  %v1025 = vpop.permute.xlu0 %1024
  %1026 = vrot.lane.b32.xlu0 %v224, 109
  %v1027 = vpop.permute.xlu0 %1026
  %1028 = vrot.lane.b32.xlu0 %v225, 109
  %v1029 = vpop.permute.xlu0 %1028
  %1030 = vrot.lane.b32.xlu0 %v226, 109
  %v1031 = vpop.permute.xlu0 %1030
  %1032 = vrot.lane.b32.xlu0 %v227, 109
  %v1033 = vpop.permute.xlu0 %1032
  %1034 = vrot.lane.b32.xlu0 %v228, 109
  %v1035 = vpop.permute.xlu0 %1034
  %1036 = vrot.lane.b32.xlu0 %v229, 109
  %v1037 = vpop.permute.xlu0 %1036
  %1038 = vrot.lane.b32.xlu0 %v230, 109
  %v1039 = vpop.permute.xlu0 %1038
  %1040 = vrot.lane.b32.xlu0 %v231, 109
  %v1041 = vpop.permute.xlu0 %1040
  %vm1042 = vcmask 891904
  %v1043 = vsel %vm1042, %v1025, %v1027
  %v1044 = vsel %vm1042, %v1027, %v1029
  %v1045 = vsel %vm1042, %v1029, %v1031
  %v1046 = vsel %vm1042, %v1031, %v1033
  %v1047 = vsel %vm1042, %v1033, %v1035
  %v1048 = vsel %vm1042, %v1035, %v1037
  %v1049 = vsel %vm1042, %v1037, %v1039
  %v1050 = vsel %vm1042, %v1039, %v1041
  %v1053 = vsel %vm705, %v69, %v116
  %v1056 = vsel %vm714, %v1053, %v169
  %v1058 = vsel %vm749, %v1056, %v205
  %v1060 = vsel %vm758, %v750, %v1043
  %v1063 = vsel %vm758, %v751, %v1044
  %v1066 = vsel %vm758, %v752, %v1045
  %v1069 = vsel %vm758, %v753, %v1046
  %v1072 = vsel %vm758, %v754, %v1047
  %v1075 = vsel %vm758, %v755, %v1048
  %v1078 = vsel %vm758, %v756, %v1049
  %v1081 = vsel %vm758, %v757, %v1050
  %v1085 = vsel %vm758, %v1058, %v1041
  %v1087 = vsel %vm793, %v1060, %v287
  %v1088 = vsel %vm793, %v1063, %v288
  %v1089 = vsel %vm793, %v1066, %v289
  %v1090 = vsel %vm793, %v1069, %v290
  %v1091 = vsel %vm793, %v1072, %v291
  %v1092 = vsel %vm793, %v1075, %v292
  %v1093 = vsel %vm793, %v1078, %v293
  %v1094 = vsel %vm793, %v1081, %v294
  %v1095 = vsel %vm793, %v1085, %v285
  %v1097 = vsel %vm802, %v1087, %v331
  %v1100 = vsel %vm802, %v1088, %v332
  %v1103 = vsel %vm802, %v1089, %v333
  %v1106 = vsel %vm802, %v1090, %v334
  %v1109 = vsel %vm802, %v1091, %v335
  %v1112 = vsel %vm802, %v1092, %v336
  %v1115 = vsel %vm802, %v1093, %v337
  %v1118 = vsel %vm802, %v1094, %v338
  %v1122 = vsel %vm802, %v1095, %v329
  %v1124 = vsel %vm837, %v1097, %v367
  %v1125 = vsel %vm837, %v1100, %v368
  %v1126 = vsel %vm837, %v1103, %v369
  %v1127 = vsel %vm837, %v1106, %v370
  %v1128 = vsel %vm837, %v1109, %v371
  %v1129 = vsel %vm837, %v1112, %v372
  %v1130 = vsel %vm837, %v1115, %v373
  %v1131 = vsel %vm837, %v1118, %v374
  %v1132 = vsel %vm837, %v1122, %v365
  %v1134 = vsel %vm846, %v1124, %v411
  %v1136 = vsel %vm846, %v1125, %v412
  %v1138 = vsel %vm846, %v1126, %v413
  %v1140 = vsel %vm846, %v1127, %v414
  %v1142 = vsel %vm846, %v1128, %v415
  %v1144 = vsel %vm846, %v1129, %v416
  %v1146 = vsel %vm846, %v1130, %v417
  %v1148 = vsel %vm846, %v1131, %v418
  %v1151 = vsel %vm846, %v1132, %v409
  %1161 = vrot.lane.b32.xlu0 %v1134, 67
  %v1162 = vpop.permute.xlu0 %1161
  %1163 = vrot.lane.b32.xlu0 %v1136, 67
  %v1164 = vpop.permute.xlu0 %1163
  %1165 = vrot.lane.b32.xlu0 %v1138, 67
  %v1166 = vpop.permute.xlu0 %1165
  %1167 = vrot.lane.b32.xlu0 %v1140, 67
  %v1168 = vpop.permute.xlu0 %1167
  %1169 = vrot.lane.b32.xlu0 %v1142, 67
  %v1170 = vpop.permute.xlu0 %1169
  %1171 = vrot.lane.b32.xlu0 %v1144, 67
  %v1172 = vpop.permute.xlu0 %1171
  %1173 = vrot.lane.b32.xlu0 %v1146, 67
  %v1174 = vpop.permute.xlu0 %1173
  %1175 = vrot.lane.b32.xlu0 %v1148, 67
  %v1176 = vpop.permute.xlu0 %1175
  %1177 = vrot.lane.b32.xlu0 %v1151, 67
  %v1178 = vpop.permute.xlu0 %1177
  %vm1179 = vcmask 547840
  %v1180 = vsel %vm1179, %v1162, %v1164
  %v1181 = vsel %vm1179, %v1164, %v1166
  %v1182 = vsel %vm1179, %v1166, %v1168
  %v1183 = vsel %vm1179, %v1168, %v1170
  %v1184 = vsel %vm1179, %v1170, %v1172
  %v1185 = vsel %vm1179, %v1172, %v1174
  %v1186 = vsel %vm1179, %v1174, %v1176
  %v1187 = vsel %vm1179, %v1176, %v1178
  %vm1188 = vcmask 203776
  %v1190 = vsel %vm1188, %v71, 0
  %v1192 = vsel %vm846, 4294967295, 65535
  %v1193 = vsel %vm890, %v1192, 0
  %v1195 = vand.u32 %v1180, %v1193
  %v1198 = vand.u32 %v1181, %v1193
  %v1201 = vand.u32 %v1182, %v1193
  %v1204 = vand.u32 %v1183, %v1193
  %v1207 = vand.u32 %v1184, %v1193
  %v1210 = vand.u32 %v1185, %v1193
  %v1213 = vand.u32 %v1186, %v1193
  %v1216 = vand.u32 %v1187, %v1193
  %1218 = vmatprep.subr.bf16.mxu0 0
  %1219 = vmatpush1.bf16.msra.mxu0 0
  %1220 = vmatprep.subr.bf16.mxu0 0
  %1221 = vmatpush1.bf16.msra.mxu0 0
  %1222 = vmatprep.subr.bf16.mxu0 0
  %1223 = vmatpush1.bf16.msra.mxu0 0
  %1224 = vmatprep.subr.bf16.mxu0 0
  %1225 = vmatpush1.bf16.msra.mxu0 0
  %1226 = vmatprep.subr.bf16.mxu0 0
  %1227 = vmatpush1.bf16.msra.mxu0 0
  %1228 = vmatprep.subr.bf16.mxu0 0
  %1229 = vmatpush1.bf16.msra.mxu0 0
  %1230 = vmatprep.subr.bf16.mxu0 %v1198
  %1231 = vmatpush1.bf16.msra.mxu0 %v1195
  %1232 = vmatprep.subr.bf16.mxu0 %v1015
  %1233 = vmatpush1.bf16.msra.mxu0 %v1014
  %1234 = vmatprep.subr.bf16.mxu0 0
  %1235 = vmatpush2.bf16.msra.mxu0 0
  %1236 = vmatprep.subr.bf16.mxu0 0
  %1237 = vmatpush2.bf16.msra.mxu0 0
  %1238 = vmatprep.subr.bf16.mxu0 0
  %1239 = vmatpush2.bf16.msra.mxu0 0
  %1240 = vmatprep.subr.bf16.mxu0 0
  %1241 = vmatpush2.bf16.msra.mxu0 0
  %1242 = vmatprep.subr.bf16.mxu0 0
  %1243 = vmatpush2.bf16.msra.mxu0 0
  %1244 = vmatprep.subr.bf16.mxu0 0
  %1245 = vmatpush2.bf16.msra.mxu0 0
  %1246 = vmatprep.subr.bf16.mxu0 0
  %1247 = vmatpush2.bf16.msra.mxu0 0
  %1248 = vmatprep.subr.bf16.mxu0 0
  %1249 = vmatpush2.bf16.msra.mxu0 0
  %1250 = vmatprep.mubr.bf16.mxu0 0
  %1251 = vmatmul.mubr.bf16.gmra.mxu0 %v1190
  %v1252 = vpop.f32.mrf.mxu0
  %v1253 = vadd.f32 0.0, %v1252
  %v1254 = vpop.f32.mrf.mxu0
  %v1255 = vadd.f32 0.0, %v1254
  %v1256 = vpop.f32.mrf.mxu0
  %v1257 = vpop.f32.mrf.mxu0
  %1258 = vdwg.mxu0
  %1259 = vmatprep.subr.bf16.mxu0 0
  %1260 = vmatpush1.bf16.msra.mxu0 0
  %1261 = vmatprep.subr.bf16.mxu0 0
  %1262 = vmatpush1.bf16.msra.mxu0 0
  %1263 = vmatprep.subr.bf16.mxu0 0
  %1264 = vmatpush1.bf16.msra.mxu0 0
  %1265 = vmatprep.subr.bf16.mxu0 0
  %1266 = vmatpush1.bf16.msra.mxu0 0
  %1267 = vmatprep.subr.bf16.mxu0 0
  %1268 = vmatpush1.bf16.msra.mxu0 0
  %1269 = vmatprep.subr.bf16.mxu0 0
  %1270 = vmatpush1.bf16.msra.mxu0 0
  %1271 = vmatprep.subr.bf16.mxu0 %v1204
  %1272 = vmatpush1.bf16.msra.mxu0 %v1201
  %1273 = vmatprep.subr.bf16.mxu0 %v1017
  %1274 = vmatpush1.bf16.msra.mxu0 %v1016
  %1275 = vmatprep.subr.bf16.mxu0 0
  %1276 = vmatpush2.bf16.msra.mxu0 0
  %1277 = vmatprep.subr.bf16.mxu0 0
  %1278 = vmatpush2.bf16.msra.mxu0 0
  %1279 = vmatprep.subr.bf16.mxu0 0
  %1280 = vmatpush2.bf16.msra.mxu0 0
  %1281 = vmatprep.subr.bf16.mxu0 0
  %1282 = vmatpush2.bf16.msra.mxu0 0
  %1283 = vmatprep.subr.bf16.mxu0 0
  %1284 = vmatpush2.bf16.msra.mxu0 0
  %1285 = vmatprep.subr.bf16.mxu0 0
  %1286 = vmatpush2.bf16.msra.mxu0 0
  %1287 = vmatprep.subr.bf16.mxu0 0
  %1288 = vmatpush2.bf16.msra.mxu0 0
  %1289 = vmatprep.subr.bf16.mxu0 0
  %1290 = vmatpush2.bf16.msra.mxu0 0
  %1291 = vmatprep.mubr.bf16.mxu0 0
  %1292 = vmatmul.mubr.bf16.gmra.mxu0 %v1190
  %v1293 = vpop.f32.mrf.mxu0
  %v1294 = vadd.f32 0.0, %v1293
  %v1295 = vpop.f32.mrf.mxu0
  %v1296 = vadd.f32 0.0, %v1295
  %v1297 = vpop.f32.mrf.mxu0
  %v1298 = vpop.f32.mrf.mxu0
  %1299 = vdwg.mxu0
  %1300 = vmatprep.subr.bf16.mxu0 0
  %1301 = vmatpush1.bf16.msra.mxu0 0
  %1302 = vmatprep.subr.bf16.mxu0 0
  %1303 = vmatpush1.bf16.msra.mxu0 0
  %1304 = vmatprep.subr.bf16.mxu0 0
  %1305 = vmatpush1.bf16.msra.mxu0 0
  %1306 = vmatprep.subr.bf16.mxu0 0
  %1307 = vmatpush1.bf16.msra.mxu0 0
  %1308 = vmatprep.subr.bf16.mxu0 0
  %1309 = vmatpush1.bf16.msra.mxu0 0
  %1310 = vmatprep.subr.bf16.mxu0 0
  %1311 = vmatpush1.bf16.msra.mxu0 0
  %1312 = vmatprep.subr.bf16.mxu0 %v1210
  %1313 = vmatpush1.bf16.msra.mxu0 %v1207
  %1314 = vmatprep.subr.bf16.mxu0 %v1019
  %1315 = vmatpush1.bf16.msra.mxu0 %v1018
  %1316 = vmatprep.subr.bf16.mxu0 0
  %1317 = vmatpush2.bf16.msra.mxu0 0
  %1318 = vmatprep.subr.bf16.mxu0 0
  %1319 = vmatpush2.bf16.msra.mxu0 0
  %1320 = vmatprep.subr.bf16.mxu0 0
  %1321 = vmatpush2.bf16.msra.mxu0 0
  %1322 = vmatprep.subr.bf16.mxu0 0
  %1323 = vmatpush2.bf16.msra.mxu0 0
  %1324 = vmatprep.subr.bf16.mxu0 0
  %1325 = vmatpush2.bf16.msra.mxu0 0
  %1326 = vmatprep.subr.bf16.mxu0 0
  %1327 = vmatpush2.bf16.msra.mxu0 0
  %1328 = vmatprep.subr.bf16.mxu0 0
  %1329 = vmatpush2.bf16.msra.mxu0 0
  %1330 = vmatprep.subr.bf16.mxu0 0
  %1331 = vmatpush2.bf16.msra.mxu0 0
  %1332 = vmatprep.mubr.bf16.mxu0 0
  %1333 = vmatmul.mubr.bf16.gmra.mxu0 %v1190
  %v1334 = vpop.f32.mrf.mxu0
  %v1335 = vadd.f32 0.0, %v1334
  %v1336 = vpop.f32.mrf.mxu0
  %v1337 = vadd.f32 0.0, %v1336
  %v1338 = vpop.f32.mrf.mxu0
  %v1339 = vpop.f32.mrf.mxu0
  %1340 = vdwg.mxu0
  %1341 = vmatprep.subr.bf16.mxu0 0
  %1342 = vmatpush1.bf16.msra.mxu0 0
  %1343 = vmatprep.subr.bf16.mxu0 0
  %1344 = vmatpush1.bf16.msra.mxu0 0
  %1345 = vmatprep.subr.bf16.mxu0 0
  %1346 = vmatpush1.bf16.msra.mxu0 0
  %1347 = vmatprep.subr.bf16.mxu0 0
  %1348 = vmatpush1.bf16.msra.mxu0 0
  %1349 = vmatprep.subr.bf16.mxu0 0
  %1350 = vmatpush1.bf16.msra.mxu0 0
  %1351 = vmatprep.subr.bf16.mxu0 0
  %1352 = vmatpush1.bf16.msra.mxu0 0
  %1353 = vmatprep.subr.bf16.mxu0 %v1216
  %1354 = vmatpush1.bf16.msra.mxu0 %v1213
  %1355 = vmatprep.subr.bf16.mxu0 %v1021
  %1356 = vmatpush1.bf16.msra.mxu0 %v1020
  %1357 = vmatprep.subr.bf16.mxu0 0
  %1358 = vmatpush2.bf16.msra.mxu0 0
  %1359 = vmatprep.subr.bf16.mxu0 0
  %1360 = vmatpush2.bf16.msra.mxu0 0
  %1361 = vmatprep.subr.bf16.mxu0 0
  %1362 = vmatpush2.bf16.msra.mxu0 0
  %1363 = vmatprep.subr.bf16.mxu0 0
  %1364 = vmatpush2.bf16.msra.mxu0 0
  %1365 = vmatprep.subr.bf16.mxu0 0
  %1366 = vmatpush2.bf16.msra.mxu0 0
  %1367 = vmatprep.subr.bf16.mxu0 0
  %1368 = vmatpush2.bf16.msra.mxu0 0
  %1369 = vmatprep.subr.bf16.mxu0 0
  %1370 = vmatpush2.bf16.msra.mxu0 0
  %1371 = vmatprep.subr.bf16.mxu0 0
  %1372 = vmatpush2.bf16.msra.mxu0 0
  %1373 = vmatprep.mubr.bf16.mxu0 0
  %1374 = vmatmul.mubr.bf16.gmra.mxu0 %v1190
  %v1375 = vpop.f32.mrf.mxu0
  %v1376 = vadd.f32 0.0, %v1375
  %v1377 = vpop.f32.mrf.mxu0
  %v1378 = vadd.f32 0.0, %v1377
  %v1379 = vpop.f32.mrf.mxu0
  %v1380 = vpop.f32.mrf.mxu0
  %1381 = vdwg.mxu0
  %1382 = vst [vmem:[%s2] sm:$0x3f] %v1253
  %1383 = vst [vmem:[%s2 + $0x8] sm:$0x3f] %v1255
  %1384 = vst [vmem:[%s2 + $0x10] sm:$0x3f] %v1294
  %1385 = vst [vmem:[%s2 + $0x18] sm:$0x3f] %v1296
  %1386 = vst [vmem:[%s2 + $0x20] sm:$0x3f] %v1335
  %1387 = vst [vmem:[%s2 + $0x28] sm:$0x3f] %v1337
  %1388 = vst [vmem:[%s2 + $0x30] sm:$0x3f] %v1376
  %1389 = vst [vmem:[%s2 + $0x38] sm:$0x3f] %v1378
  // Predicated region
  $region10: #{trainable_gabor_filter2_forward.1} parent=0 // pred_check
    _
  $region11: #{trainable_gabor_filter2_forward.1} parent=0 // pred_check_branch
    %1391 = sbr.rel (0) target = $region13
  $region12: #{trainable_gabor_filter2_forward.1} parent=0 // pred_region
    _
  $region13: #{trainable_gabor_filter2_forward.1} parent=0 // pred_fallthru
    _
  // Predicated region
  $region14: #{trainable_gabor_filter2_forward.1} parent=0 // pred_check
    _
  $region15: #{trainable_gabor_filter2_forward.1} parent=0 // pred_check_branch
    %1393 = sbr.rel (0) target = $region17
  $region16: #{trainable_gabor_filter2_forward.1} parent=0 // pred_region
    _
  $region17: #{trainable_gabor_filter2_forward.1} parent=0 // pred_fallthru
    _

</llo_original>
